<compile_context>
chip_gen: v7x
topology: tpu7x:2x2x1
jax: 0.10.0
libtpu: 0.0.40
codegen_flags: <defaults>
</compile_context>

<pallas_src>
import functools

import jax
import jax.numpy as jnp
from jax.experimental import pallas as pl
from jax.experimental.pallas import tpu as pltpu

LANE = 128
SUBLANE = 8


def _round_up(v, m):
    return ((v + m - 1) // m) * m


# ----------------------------------------------------------------------------
# Kernels
# ----------------------------------------------------------------------------
def _silu(x):
    # exp and the approximate reciprocal both execute on the EUP slot, keeping
    # the VPU free for the BN affine / residual add.
    return x * pl.reciprocal(1.0 + jnp.exp(-x), approx=True)


def _resblock_kernel_proj(x_ref, s1_ref, t1_ref, w1_ref, b1_ref,
                          w2_ref, b2_ref, ws_ref, o_ref):
    """ResidualBlock with nin_shortcut (in_channels != out_channels).

    b2_ref already contains (b2 + bs); ws carries no bias.
    """
    x = x_ref[...].astype(jnp.float32)

    # net1 + BN2 folded: silu(bn1(x)) @ (w1*s2) + (b1*s2 + t2)
    h = _silu(x * s1_ref[...] + t1_ref[...])
    h = jnp.dot(h.astype(jnp.bfloat16), w1_ref[...],
                preferred_element_type=jnp.float32) + b1_ref[...]

    # net2 tail: SiLU -> (Dropout = id) -> Linear2 (bias carries shortcut bias)
    h = _silu(h)
    h = jnp.dot(h.astype(jnp.bfloat16), w2_ref[...],
                preferred_element_type=jnp.float32) + b2_ref[...]

    # shortcut projection (bias folded into b2) + residual add
    x_bf = x_ref[...].astype(jnp.bfloat16)
    sc = jnp.dot(x_bf, ws_ref[...], preferred_element_type=jnp.float32)
    o_ref[...] = (sc + h).astype(o_ref.dtype)


def _resblock_kernel_id(x_ref, s1_ref, t1_ref, w1_ref, b1_ref,
                        w2_ref, b2_ref, o_ref):
    """ResidualBlock with identity shortcut (in_channels == out_channels)."""
    x = x_ref[...].astype(jnp.float32)

    h = _silu(x * s1_ref[...] + t1_ref[...])
    h = jnp.dot(h.astype(jnp.bfloat16), w1_ref[...],
                preferred_element_type=jnp.float32) + b1_ref[...]
    h = _silu(h)
    h = jnp.dot(h.astype(jnp.bfloat16), w2_ref[...],
                preferred_element_type=jnp.float32) + b2_ref[...]

    o_ref[...] = (x + h).astype(o_ref.dtype)


# ----------------------------------------------------------------------------
# Wrapper: parameter folding, padding, tiling, pallas_call plumbing.
# ----------------------------------------------------------------------------
def _fold_bn(gamma, beta, running_mean, running_var, eps=1e-5):
    """Fold eval-mode BatchNorm1d into per-channel scale/shift (1-D vectors)."""
    scale = gamma / jnp.sqrt(running_var + eps)
    shift = beta - running_mean * scale
    return scale, shift


def _pad_row(v, cols):
    v = v.reshape(1, -1)
    return jnp.pad(v, ((0, 0), (0, cols - v.shape[1])))


def _pad_mat(w, rows, cols, dtype):
    w = jnp.pad(w, ((0, rows - w.shape[0]), (0, cols - w.shape[1])))
    return w.astype(dtype)


@functools.partial(jax.jit, static_argnames=("has_shortcut",))
def residual_block_forward(x, params, *, has_shortcut):
    N, C_in = x.shape
    C_out = params["w1"].shape[1]

    # Lane-dense channel padding (zeros are exact: padded channels stay 0 end
    # to end and are sliced off the output).
    C_in_p = _round_up(C_in, LANE)
    C_out_p = _round_up(C_out, LANE)

    # --- batch tile selection against a conservative VMEM budget -----------
    def vmem_estimate(tn):
        act = 2 * tn * (C_in_p + C_out_p) * 4          # double-buffered x/out, f32
        wts = (C_in_p * C_out_p + C_out_p * C_out_p
               + (C_in_p * C_out_p if has_shortcut else 0)) * 2 * 2  # bf16, 2 bufs
        scratch = 3 * tn * C_out_p * 4                 # in-kernel f32 intermediates
        return act + wts + scratch

    tile_n = min(512, _round_up(N, SUBLANE))
    while tile_n > SUBLANE and vmem_estimate(tile_n) > 20 * 1024 * 1024:
        tile_n = _round_up(max(SUBLANE, tile_n // 2), SUBLANE)
    N_p = _round_up(N, tile_n)
    grid = N_p // tile_n
    vmem_limit = int(min(48 * 1024 * 1024,
                         max(32 * 1024 * 1024, 2 * vmem_estimate(tile_n))))

    # --- fold BN1 -> scale/shift, BN2 -> into Linear1 weight/bias -----------
    s1, t1 = _fold_bn(params["bn1_gamma"], params["bn1_beta"],
                      params["bn1_mean"], params["bn1_var"])
    s2, t2 = _fold_bn(params["bn2_gamma"], params["bn2_beta"],
                      params["bn2_mean"], params["bn2_var"])
    w1f = params["w1"] * s2[None, :]
    b1f = params["b1"] * s2 + t2
    # Fold shortcut bias into the second Linear bias (one fewer vector add).
    b2f = params["b2"] + params["bs"] if has_shortcut else params["b2"]

    # --- pad / cast parameters ----------------------------------------------
    x_p = jnp.pad(x, ((0, N_p - N), (0, C_in_p - C_in)))
    s1_p = _pad_row(s1, C_in_p)
    t1_p = _pad_row(t1, C_in_p)
    w1_p = _pad_mat(w1f, C_in_p, C_out_p, jnp.bfloat16)
    b1_p = _pad_row(b1f, C_out_p)
    w2_p = _pad_mat(params["w2"], C_out_p, C_out_p, jnp.bfloat16)
    b2_p = _pad_row(b2f, C_out_p)

    def resident(shape):
        return pl.BlockSpec(shape, lambda i: (0, 0))

    x_spec = pl.BlockSpec((tile_n, C_in_p), lambda i: (i, 0))
    out_spec = pl.BlockSpec((tile_n, C_out_p), lambda i: (i, 0))

    inputs = [x_p, s1_p, t1_p, w1_p, b1_p, w2_p, b2_p]
    in_specs = [x_spec, resident(s1_p.shape), resident(t1_p.shape),
                resident(w1_p.shape), resident(b1_p.shape),
                resident(w2_p.shape), resident(b2_p.shape)]

    if has_shortcut:
        ws_p = _pad_mat(params["ws"], C_in_p, C_out_p, jnp.bfloat16)
        inputs += [ws_p]
        in_specs += [resident(ws_p.shape)]
        kernel = _resblock_kernel_proj
    else:
        kernel = _resblock_kernel_id

    # advisory cost for XLA's scheduler
    mm_flops = C_in_p * C_out_p + C_out_p * C_out_p \
        + (C_in_p * C_out_p if has_shortcut else 0)
    cost = pl.CostEstimate(
        flops=2 * N_p * mm_flops,
        transcendentals=2 * N_p * (C_in_p + C_out_p),   # exp + reciprocal
        bytes_accessed=N_p * (C_in_p + C_out_p) * 4 + mm_flops * 2,
    )

    out_p = pl.pallas_call(
        kernel,
        out_shape=jax.ShapeDtypeStruct((N_p, C_out_p), x.dtype),
        grid_spec=pltpu.PrefetchScalarGridSpec(
            num_scalar_prefetch=0,
            grid=(grid,),
            in_specs=in_specs,
            out_specs=out_spec,
        ),
        compiler_params=pltpu.CompilerParams(
            dimension_semantics=("parallel",),
            vmem_limit_bytes=vmem_limit,
        ),
        cost_estimate=cost,
    )(*inputs)

    return out_p[:N, :C_out]


# ----------------------------------------------------------------------------
# Deterministic parameter construction (matching __init__ shapes).
# ----------------------------------------------------------------------------
def make_params(key, in_channels, out_channels):
    keys = jax.random.split(key, 8)
    lim1 = 1.0 / jnp.sqrt(in_channels)
    lim2 = 1.0 / jnp.sqrt(out_channels)
    params = {
        "bn1_gamma": jnp.ones((in_channels,), jnp.float32),
        "bn1_beta": jax.random.uniform(keys[0], (in_channels,), jnp.float32, -0.1, 0.1),
        "bn1_mean": jnp.zeros((in_channels,), jnp.float32),
        "bn1_var": jnp.ones((in_channels,), jnp.float32),
        "w1": jax.random.uniform(keys[1], (in_channels, out_channels), jnp.float32, -lim1, lim1),
        "b1": jax.random.uniform(keys[2], (out_channels,), jnp.float32, -lim1, lim1),
        "bn2_gamma": jnp.ones((out_channels,), jnp.float32),
        "bn2_beta": jax.random.uniform(keys[3], (out_channels,), jnp.float32, -0.1, 0.1),
        "bn2_mean": jnp.zeros((out_channels,), jnp.float32),
        "bn2_var": jnp.ones((out_channels,), jnp.float32),
        "w2": jax.random.uniform(keys[4], (out_channels, out_channels), jnp.float32, -lim2, lim2),
        "b2": jax.random.uniform(keys[5], (out_channels,), jnp.float32, -lim2, lim2),
    }
    if in_channels != out_channels:
        params["ws"] = jax.random.uniform(keys[6], (in_channels, out_channels), jnp.float32, -lim1, lim1)
        params["bs"] = jax.random.uniform(keys[7], (out_channels,), jnp.float32, -lim1, lim1)
    return params


def reference_forward(x, params, has_shortcut):
    """Plain-JAX f32 reference of the eval-mode forward pass."""
    s1, t1 = _fold_bn(params["bn1_gamma"], params["bn1_beta"],
                      params["bn1_mean"], params["bn1_var"])
    s2, t2 = _fold_bn(params["bn2_gamma"], params["bn2_beta"],
                      params["bn2_mean"], params["bn2_var"])
    h = x * s1 + t1
    h = h * jax.nn.sigmoid(h)
    h = h @ params["w1"] + params["b1"]
    h = h * s2 + t2
    h = h * jax.nn.sigmoid(h)
    h = h @ params["w2"] + params["b2"]
    sc = x @ params["ws"] + params["bs"] if has_shortcut else x
    return sc + h


if __name__ == "__main__":
    key = jax.random.PRNGKey(0)

    # Case 1: projected shortcut (in_channels != out_channels)
    k_x, k_p, k_x2, k_p2 = jax.random.split(key, 4)
    N, C_in, C_out = 8, 32, 64
    x = jax.random.normal(k_x, (N, C_in), jnp.float32)
    params = make_params(k_p, C_in, C_out)
    out = jax.block_until_ready(
        residual_block_forward(x, params, has_shortcut=True))
    ref = reference_forward(x, params, True)
    assert out.shape == (N, C_out)
    # bf16 MXU operands (f32 accumulation) -> loosened tolerance vs f32 ref.
    assert jnp.allclose(out, ref, atol=5e-2, rtol=5e-2), "proj mismatch vs reference"

    # Case 2: identity shortcut (in_channels == out_channels)
    N2, C2 = 16, 48
    x2 = jax.random.normal(k_x2, (N2, C2), jnp.float32)
    params2 = make_params(k_p2, C2, C2)
    out2 = jax.block_until_ready(
        residual_block_forward(x2, params2, has_shortcut=False))
    ref2 = reference_forward(x2, params2, False)
    assert out2.shape == (N2, C2)
    assert jnp.allclose(out2, ref2, atol=5e-2, rtol=5e-2), "id mismatch vs reference"

    print("KERNEL_OK")
</pallas_src>

<mosaic_0001>
module attributes {stable_mosaic.version = 11 : i64} {
  func.func @_resblock_kernel_proj(%arg0: i32, %arg1: memref<8x128xf32, #tpu.memory_space<vmem>>, %arg2: memref<1x128xf32, #tpu.memory_space<vmem>>, %arg3: memref<1x128xf32, #tpu.memory_space<vmem>>, %arg4: memref<128x128xbf16, #tpu.memory_space<vmem>>, %arg5: memref<1x128xf32, #tpu.memory_space<vmem>>, %arg6: memref<128x128xbf16, #tpu.memory_space<vmem>>, %arg7: memref<1x128xf32, #tpu.memory_space<vmem>>, %arg8: memref<128x128xbf16, #tpu.memory_space<vmem>>, %arg9: memref<8x128xf32, #tpu.memory_space<vmem>>) attributes {dimension_semantics = [#tpu.dimension_semantics<parallel>], iteration_bounds = array<i64: 1>, scalar_prefetch = 0 : i64, scratch_operands = 0 : i64, tpu.core_type = #tpu.core_type<tc>, window_params = [{transform_indices = @transform_0, window_bounds = array<i64: 8, 128>}, {pipeline_mode = #tpu.pipeline_mode<synchronous>, transform_indices = @transform_1, window_bounds = array<i64: 1, 128>}, {pipeline_mode = #tpu.pipeline_mode<synchronous>, transform_indices = @transform_2, window_bounds = array<i64: 1, 128>}, {pipeline_mode = #tpu.pipeline_mode<synchronous>, transform_indices = @transform_3, window_bounds = array<i64: 128, 128>}, {pipeline_mode = #tpu.pipeline_mode<synchronous>, transform_indices = @transform_4, window_bounds = array<i64: 1, 128>}, {pipeline_mode = #tpu.pipeline_mode<synchronous>, transform_indices = @transform_5, window_bounds = array<i64: 128, 128>}, {pipeline_mode = #tpu.pipeline_mode<synchronous>, transform_indices = @transform_6, window_bounds = array<i64: 1, 128>}, {pipeline_mode = #tpu.pipeline_mode<synchronous>, transform_indices = @transform_7, window_bounds = array<i64: 128, 128>}, {transform_indices = @transform_8, window_bounds = array<i64: 8, 128>}]} {
    %c0 = arith.constant 0 : index
    %c0_0 = arith.constant 0 : index
    %0 = vector.load %arg1[%c0, %c0_0] : memref<8x128xf32, #tpu.memory_space<vmem>>, vector<8x128xf32>
    %c0_1 = arith.constant 0 : index
    %c0_2 = arith.constant 0 : index
    %1 = vector.load %arg2[%c0_1, %c0_2] : memref<1x128xf32, #tpu.memory_space<vmem>>, vector<1x128xf32>
    %2 = vector.broadcast %1 : vector<1x128xf32> to vector<8x128xf32>
    %3 = arith.mulf %0, %2 : vector<8x128xf32>
    %c0_3 = arith.constant 0 : index
    %c0_4 = arith.constant 0 : index
    %4 = vector.load %arg3[%c0_3, %c0_4] : memref<1x128xf32, #tpu.memory_space<vmem>>, vector<1x128xf32>
    %5 = vector.broadcast %4 : vector<1x128xf32> to vector<8x128xf32>
    %6 = arith.addf %3, %5 : vector<8x128xf32>
    %cst = arith.constant 0.000000e+00 : f32
    %7 = vector.broadcast %cst : f32 to vector<8x128xf32>
    %8 = arith.subf %7, %6 : vector<8x128xf32>
    %9 = math.exp %8 : vector<8x128xf32>
    %cst_5 = arith.constant 1.000000e+00 : f32
    %10 = vector.broadcast %cst_5 : f32 to vector<8x128xf32>
    %11 = arith.addf %10, %9 : vector<8x128xf32>
    %12 = tpu.reciprocal %11 {approx = true} : vector<8x128xf32> -> vector<8x128xf32>
    %13 = arith.mulf %6, %12 : vector<8x128xf32>
    %14 = arith.truncf %13 : vector<8x128xf32> to vector<8x128xbf16>
    %c0_6 = arith.constant 0 : index
    %c0_7 = arith.constant 0 : index
    %15 = vector.load %arg4[%c0_6, %c0_7] : memref<128x128xbf16, #tpu.memory_space<vmem>>, vector<128x128xbf16>
    %cst_8 = arith.constant dense<0.000000e+00> : vector<8x128xf32>
    %16 = tpu.matmul %14, %15, %cst_8 {dimension_numbers = #tpu.dot_dimension_numbers<[1], [0], [0], [1], [0, 0, 1, 1], [], []>} : vector<8x128xbf16>, vector<128x128xbf16>, vector<8x128xf32> -> vector<8x128xf32>
    %c0_9 = arith.constant 0 : index
    %c0_10 = arith.constant 0 : index
    %17 = vector.load %arg5[%c0_9, %c0_10] : memref<1x128xf32, #tpu.memory_space<vmem>>, vector<1x128xf32>
    %18 = vector.broadcast %17 : vector<1x128xf32> to vector<8x128xf32>
    %19 = arith.addf %16, %18 : vector<8x128xf32>
    %cst_11 = arith.constant 0.000000e+00 : f32
    %20 = vector.broadcast %cst_11 : f32 to vector<8x128xf32>
    %21 = arith.subf %20, %19 : vector<8x128xf32>
    %22 = math.exp %21 : vector<8x128xf32>
    %cst_12 = arith.constant 1.000000e+00 : f32
    %23 = vector.broadcast %cst_12 : f32 to vector<8x128xf32>
    %24 = arith.addf %23, %22 : vector<8x128xf32>
    %25 = tpu.reciprocal %24 {approx = true} : vector<8x128xf32> -> vector<8x128xf32>
    %26 = arith.mulf %19, %25 : vector<8x128xf32>
    %27 = arith.truncf %26 : vector<8x128xf32> to vector<8x128xbf16>
    %c0_13 = arith.constant 0 : index
    %c0_14 = arith.constant 0 : index
    %28 = vector.load %arg6[%c0_13, %c0_14] : memref<128x128xbf16, #tpu.memory_space<vmem>>, vector<128x128xbf16>
    %cst_15 = arith.constant dense<0.000000e+00> : vector<8x128xf32>
    %29 = tpu.matmul %27, %28, %cst_15 {dimension_numbers = #tpu.dot_dimension_numbers<[1], [0], [0], [1], [0, 0, 1, 1], [], []>} : vector<8x128xbf16>, vector<128x128xbf16>, vector<8x128xf32> -> vector<8x128xf32>
    %c0_16 = arith.constant 0 : index
    %c0_17 = arith.constant 0 : index
    %30 = vector.load %arg7[%c0_16, %c0_17] : memref<1x128xf32, #tpu.memory_space<vmem>>, vector<1x128xf32>
    %31 = vector.broadcast %30 : vector<1x128xf32> to vector<8x128xf32>
    %32 = arith.addf %29, %31 : vector<8x128xf32>
    %c0_18 = arith.constant 0 : index
    %c0_19 = arith.constant 0 : index
    %33 = vector.load %arg1[%c0_18, %c0_19] : memref<8x128xf32, #tpu.memory_space<vmem>>, vector<8x128xf32>
    %34 = arith.truncf %33 : vector<8x128xf32> to vector<8x128xbf16>
    %c0_20 = arith.constant 0 : index
    %c0_21 = arith.constant 0 : index
    %35 = vector.load %arg8[%c0_20, %c0_21] : memref<128x128xbf16, #tpu.memory_space<vmem>>, vector<128x128xbf16>
    %cst_22 = arith.constant dense<0.000000e+00> : vector<8x128xf32>
    %36 = tpu.matmul %34, %35, %cst_22 {dimension_numbers = #tpu.dot_dimension_numbers<[1], [0], [0], [1], [0, 0, 1, 1], [], []>} : vector<8x128xbf16>, vector<128x128xbf16>, vector<8x128xf32> -> vector<8x128xf32>
    %37 = arith.addf %36, %32 : vector<8x128xf32>
    %c0_23 = arith.constant 0 : index
    %c0_24 = arith.constant 0 : index
    %38 = vector.load %arg9[%c0_23, %c0_24] : memref<8x128xf32, #tpu.memory_space<vmem>>, vector<8x128xf32>
    tpu.vector_store %arg9[%c0_23, %c0_24], %37 {strides = array<i32>} : memref<8x128xf32, #tpu.memory_space<vmem>>, vector<8x128xf32>,
    return
  }
  func.func @transform_0(%arg0: i32) -> (i32, i32) {
    %c0_i32 = arith.constant 0 : i32
    %c0_i32_0 = arith.constant 0 : i32
    return %arg0, %c0_i32 : i32, i32
  }
  func.func @transform_1(%arg0: i32) -> (i32, i32) {
    %c0_i32 = arith.constant 0 : i32
    %c0_i32_0 = arith.constant 0 : i32
    %c0_i32_1 = arith.constant 0 : i32
    return %c0_i32, %c0_i32_0 : i32, i32
  }
  func.func @transform_2(%arg0: i32) -> (i32, i32) {
    %c0_i32 = arith.constant 0 : i32
    %c0_i32_0 = arith.constant 0 : i32
    %c0_i32_1 = arith.constant 0 : i32
    return %c0_i32, %c0_i32_0 : i32, i32
  }
  func.func @transform_3(%arg0: i32) -> (i32, i32) {
    %c0_i32 = arith.constant 0 : i32
    %c0_i32_0 = arith.constant 0 : i32
    %c0_i32_1 = arith.constant 0 : i32
    return %c0_i32, %c0_i32_0 : i32, i32
  }
  func.func @transform_4(%arg0: i32) -> (i32, i32) {
    %c0_i32 = arith.constant 0 : i32
    %c0_i32_0 = arith.constant 0 : i32
    %c0_i32_1 = arith.constant 0 : i32
    return %c0_i32, %c0_i32_0 : i32, i32
  }
  func.func @transform_5(%arg0: i32) -> (i32, i32) {
    %c0_i32 = arith.constant 0 : i32
    %c0_i32_0 = arith.constant 0 : i32
    %c0_i32_1 = arith.constant 0 : i32
    return %c0_i32, %c0_i32_0 : i32, i32
  }
  func.func @transform_6(%arg0: i32) -> (i32, i32) {
    %c0_i32 = arith.constant 0 : i32
    %c0_i32_0 = arith.constant 0 : i32
    %c0_i32_1 = arith.constant 0 : i32
    return %c0_i32, %c0_i32_0 : i32, i32
  }
  func.func @transform_7(%arg0: i32) -> (i32, i32) {
    %c0_i32 = arith.constant 0 : i32
    %c0_i32_0 = arith.constant 0 : i32
    %c0_i32_1 = arith.constant 0 : i32
    return %c0_i32, %c0_i32_0 : i32, i32
  }
  func.func @transform_8(%arg0: i32) -> (i32, i32) {
    %c0_i32 = arith.constant 0 : i32
    %c0_i32_0 = arith.constant 0 : i32
    return %arg0, %c0_i32 : i32, i32
  }
}

</mosaic_0001>

<llo_original>
// kernel: residual_block_forward.1
$region0: #{residual_block_forward.1}
  #allocation0 [shape = 'u32[]', space=smem, size = 0x4, offset = 0x4, fixed_abs, tag = 'smem constant byte address 0x4 - core index']
  #allocation1 [shape = 'u32[144,128]{1,0:T(1,128)}', space=vmem, size = 0x12000, scoped, tag = 'internal scratch']
  %s0 = inlined_call_operand.vmem [shape: f32[8,128], index: 0, kind: input, shape index: {}]
  %s1 = inlined_call_operand.vmem [shape: f32[1,128], index: 1, kind: input, shape index: {}]
  %s2 = inlined_call_operand.vmem [shape: f32[1,128], index: 2, kind: input, shape index: {}]
  %s3 = inlined_call_operand.vmem [shape: bf16[128,128], index: 3, kind: input, shape index: {}]
  %s4 = inlined_call_operand.vmem [shape: f32[1,128], index: 4, kind: input, shape index: {}]
  %s5 = inlined_call_operand.vmem [shape: bf16[128,128], index: 5, kind: input, shape index: {}]
  %s6 = inlined_call_operand.vmem [shape: f32[1,128], index: 6, kind: input, shape index: {}]
  %s7 = inlined_call_operand.vmem [shape: bf16[128,128], index: 7, kind: input, shape index: {}]
  %s8 = inlined_call_operand.hbm [shape: f32[8,128], index: 8, kind: output, shape index: {}]
  %s9 = sld [smem:[#allocation0]]
  $region42: #{residual_block_forward.1} parent=0
    _
  %s11 = ssub.s32 1, %s9
  %s12 = scalar_select 0, %s11, %s9
  $region1: #{residual_block_forward.1} parent=0
    #allocation2 [shape = 'u8[4096]{0}', space=vmem, size = 0x1000, scoped, tag = 'output window, operand 0, single buffered']
    #allocation3 [shape = 's32[1]{0}', space=sflag, size = 0x4, scoped, tag = 'scoped memory for residual_block_forward.1']
    %13 = vsyncpa [#allocation3], 0
    // Predicated region
    $region2: #{residual_block_forward.1} parent=1 // pred_check
      _
    $region3: #{residual_block_forward.1} parent=1 // pred_check_branch
      %15 = sbr.rel (0) target = $region5
    $region4: #{residual_block_forward.1} parent=1 // pred_region
      _
    $region5: #{residual_block_forward.1} parent=1 // pred_fallthru
      _
    // Predicated region
    $region6: #{residual_block_forward.1} parent=1 // pred_check
      _
    $region7: #{residual_block_forward.1} parent=1 // pred_check_branch
      %17 = sbr.rel (0) target = $region9
    $region8: #{residual_block_forward.1} parent=1 // pred_region
      _
    $region9: #{residual_block_forward.1} parent=1 // pred_fallthru
      _
    // Predicated region
    $region10: #{residual_block_forward.1} parent=1 // pred_check
      _
    $region11: #{residual_block_forward.1} parent=1 // pred_check_branch
      %19 = sbr.rel (0) target = $region13
    $region12: #{residual_block_forward.1} parent=1 // pred_region
      _
    $region13: #{residual_block_forward.1} parent=1 // pred_fallthru
      _
    // Predicated region
    $region14: #{residual_block_forward.1} parent=1 // pred_check
      _
    $region15: #{residual_block_forward.1} parent=1 // pred_check_branch
      %21 = sbr.rel (0) target = $region17
    $region16: #{residual_block_forward.1} parent=1 // pred_region
      _
    $region17: #{residual_block_forward.1} parent=1 // pred_fallthru
      _
    // Predicated region
    $region18: #{residual_block_forward.1} parent=1 // pred_check
      _
    $region19: #{residual_block_forward.1} parent=1 // pred_check_branch
      %23 = sbr.rel (0) target = $region21
    $region20: #{residual_block_forward.1} parent=1 // pred_region
      _
    $region21: #{residual_block_forward.1} parent=1 // pred_fallthru
      _
    // Predicated region
    $region22: #{residual_block_forward.1} parent=1 // pred_check
      _
    $region23: #{residual_block_forward.1} parent=1 // pred_check_branch
      %25 = sbr.rel (0) target = $region25
    $region24: #{residual_block_forward.1} parent=1 // pred_region
      _
    $region25: #{residual_block_forward.1} parent=1 // pred_fallthru
      _
    // Predicated region
    $region26: #{residual_block_forward.1} parent=1 // pred_check
      _
    $region27: #{residual_block_forward.1} parent=1 // pred_check_branch
      %27 = sbr.rel (0) target = $region29
    $region28: #{residual_block_forward.1} parent=1 // pred_region
      _
    $region29: #{residual_block_forward.1} parent=1 // pred_fallthru
      _
    // Predicated region
    $region30: #{residual_block_forward.1} parent=1 // pred_check
      _
    $region31: #{residual_block_forward.1} parent=1 // pred_check_branch
      %29 = sbr.rel (0) target = $region33
    $region32: #{residual_block_forward.1} parent=1 // pred_region
      _
    $region33: #{residual_block_forward.1} parent=1 // pred_fallthru
      _
    %v31 = vld [vmem:[%s0] sm:$0xff]
    %v32 = vld [vmem:[%s1] sm:$0x1]
    %v34 = vlaneseq
    %v35 = vshrl.u32 %v34, 7
    %v36 = vsub.s32 0, %v35
    %v37 = vrot.slane %v32, %v36
    %v39 = vmul.f32 %v31, %v37
    %v40 = vld [vmem:[%s2] sm:$0x1]
    %v42 = vlaneseq
    %v43 = vshrl.u32 %v42, 7
    %v44 = vsub.s32 0, %v43
    %v45 = vrot.slane %v40, %v44
    %v47 = vadd.f32 %v39, %v45
    %v48 = vsub.f32 0.0, %v47
    %v49 = vmul.f32 %v48, 1.442695
    %v50 = vpow.pop %v49
    %v51 = vadd.f32 %v50, 1.0
    %v52 = vrcp.pop %v51
    %v53 = vmul.f32 %v47, %v52
    %v54 = vpack.c.bf16 %v53, %v53
    %v55 = vld [vmem:[%s3] sm:$0xf]
    %v56 = vld [vmem:[%s3 + $0x4] sm:$0xf]
    %v57 = vld [vmem:[%s3 + $0x8] sm:$0xf]
    %v58 = vld [vmem:[%s3 + $0xc] sm:$0xf]
    %v59 = vld [vmem:[%s3 + $0x10] sm:$0xf]
    %v60 = vld [vmem:[%s3 + $0x14] sm:$0xf]
    %v61 = vld [vmem:[%s3 + $0x18] sm:$0xf]
    %v62 = vld [vmem:[%s3 + $0x1c] sm:$0xf]
    %v63 = vld [vmem:[%s3 + $0x20] sm:$0xf]
    %v64 = vld [vmem:[%s3 + $0x24] sm:$0xf]
    %v65 = vld [vmem:[%s3 + $0x28] sm:$0xf]
    %v66 = vld [vmem:[%s3 + $0x2c] sm:$0xf]
    %v67 = vld [vmem:[%s3 + $0x30] sm:$0xf]
    %v68 = vld [vmem:[%s3 + $0x34] sm:$0xf]
    %v69 = vld [vmem:[%s3 + $0x38] sm:$0xf]
    %v70 = vld [vmem:[%s3 + $0x3c] sm:$0xf]
    %v71 = vld [vmem:[%s4] sm:$0x1]
    %v73 = vlaneseq
    %v74 = vshrl.u32 %v73, 7
    %v75 = vsub.s32 0, %v74
    %v76 = vrot.slane %v71, %v75
    %v94 = vunpack.c.l.b16 %v55
    %v95 = vunpack.c.l.b16 %v56
    %v96 = vunpack.c.l.b16 %v57
    %v97 = vunpack.c.l.b16 %v58
    %v98 = vunpack.c.l.b16 %v59
    %v99 = vunpack.c.l.b16 %v60
    %v100 = vunpack.c.l.b16 %v61
    %v101 = vunpack.c.l.b16 %v62
    %v102 = vunpack.c.l.b16 %v63
    %v103 = vunpack.c.l.b16 %v64
    %v104 = vunpack.c.l.b16 %v65
    %v105 = vunpack.c.l.b16 %v66
    %v106 = vunpack.c.l.b16 %v67
    %v107 = vunpack.c.l.b16 %v68
    %v108 = vunpack.c.l.b16 %v69
    %v109 = vunpack.c.l.b16 %v70
    %v110 = vpack.c.b16 %v95, %v94
    %v111 = vpack.c.b16 %v97, %v96
    %v112 = vpack.c.b16 %v99, %v98
    %v113 = vpack.c.b16 %v101, %v100
    %v114 = vpack.c.b16 %v103, %v102
    %v115 = vpack.c.b16 %v105, %v104
    %v116 = vpack.c.b16 %v107, %v106
    %v117 = vpack.c.b16 %v109, %v108
    %126 = vmatprep.subr.bf16.mxu0 0
    %127 = vmatpush1.bf16.msra.mxu0 %v110
    %128 = vmatprep.subr.bf16.mxu0 0
    %129 = vmatpush1.bf16.msra.mxu0 %v111
    %130 = vmatprep.subr.bf16.mxu0 0
    %131 = vmatpush1.bf16.msra.mxu0 %v112
    %132 = vmatprep.subr.bf16.mxu0 0
    %133 = vmatpush1.bf16.msra.mxu0 %v113
    %134 = vmatprep.subr.bf16.mxu0 0
    %135 = vmatpush1.bf16.msra.mxu0 %v114
    %136 = vmatprep.subr.bf16.mxu0 0
    %137 = vmatpush1.bf16.msra.mxu0 %v115
    %138 = vmatprep.subr.bf16.mxu0 0
    %139 = vmatpush1.bf16.msra.mxu0 %v116
    %140 = vmatprep.subr.bf16.mxu0 0
    %141 = vmatpush1.bf16.msra.mxu0 %v117
    %142 = vmatprep.subr.bf16.mxu0 0
    %143 = vmatpush1.bf16.msra.mxu0 0
    %144 = vmatprep.subr.bf16.mxu0 0
    %145 = vmatpush1.bf16.msra.mxu0 0
    %146 = vmatprep.subr.bf16.mxu0 0
    %147 = vmatpush1.bf16.msra.mxu0 0
    %148 = vmatprep.subr.bf16.mxu0 0
    %149 = vmatpush1.bf16.msra.mxu0 0
    %150 = vmatprep.subr.bf16.mxu0 0
    %151 = vmatpush1.bf16.msra.mxu0 0
    %152 = vmatprep.subr.bf16.mxu0 0
    %153 = vmatpush1.bf16.msra.mxu0 0
    %154 = vmatprep.subr.bf16.mxu0 0
    %155 = vmatpush1.bf16.msra.mxu0 0
    %156 = vmatprep.subr.bf16.mxu0 0
    %157 = vmatpush1.bf16.msra.mxu0 0
    %158 = vmatprep.mubr.bf16.mxu0 0
    %159 = vmatmul.mubr.bf16.gmra.mrb[0].mxu0 %v54
    %v160 = vpop.f32.mrb[0].mxu0
    %v161 = vadd.f32 %v76, %v160
    %v162 = vpop.f32.mrb[0].mxu0
    %v163 = vpop.f32.mrb[0].mxu0
    %v164 = vpop.f32.mrb[0].mxu0
    %165 = vdwg.mxu0
    %v166 = vsub.f32 0.0, %v161
    %v167 = vmul.f32 %v166, 1.442695
    %v168 = vpow.pop %v167
    %v169 = vadd.f32 %v168, 1.0
    %v170 = vrcp.pop %v169
    %v171 = vmul.f32 %v161, %v170
    %v172 = vpack.c.bf16 %v171, %v171
    %v173 = vld [vmem:[%s5] sm:$0xf]
    %v174 = vld [vmem:[%s5 + $0x4] sm:$0xf]
    %v175 = vld [vmem:[%s5 + $0x8] sm:$0xf]
    %v176 = vld [vmem:[%s5 + $0xc] sm:$0xf]
    %v177 = vld [vmem:[%s5 + $0x10] sm:$0xf]
    %v178 = vld [vmem:[%s5 + $0x14] sm:$0xf]
    %v179 = vld [vmem:[%s5 + $0x18] sm:$0xf]
    %v180 = vld [vmem:[%s5 + $0x1c] sm:$0xf]
    %v181 = vld [vmem:[%s5 + $0x20] sm:$0xf]
    %v182 = vld [vmem:[%s5 + $0x24] sm:$0xf]
    %v183 = vld [vmem:[%s5 + $0x28] sm:$0xf]
    %v184 = vld [vmem:[%s5 + $0x2c] sm:$0xf]
    %v185 = vld [vmem:[%s5 + $0x30] sm:$0xf]
    %v186 = vld [vmem:[%s5 + $0x34] sm:$0xf]
    %v187 = vld [vmem:[%s5 + $0x38] sm:$0xf]
    %v188 = vld [vmem:[%s5 + $0x3c] sm:$0xf]
    %v189 = vld [vmem:[%s6] sm:$0x1]
    %v191 = vlaneseq
    %v192 = vshrl.u32 %v191, 7
    %v193 = vsub.s32 0, %v192
    %v194 = vrot.slane %v189, %v193
    %v212 = vunpack.c.l.b16 %v173
    %v213 = vunpack.c.l.b16 %v174
    %v214 = vunpack.c.l.b16 %v175
    %v215 = vunpack.c.l.b16 %v176
    %v216 = vunpack.c.l.b16 %v177
    %v217 = vunpack.c.l.b16 %v178
    %v218 = vunpack.c.l.b16 %v179
    %v219 = vunpack.c.l.b16 %v180
    %v220 = vunpack.c.l.b16 %v181
    %v221 = vunpack.c.l.b16 %v182
    %v222 = vunpack.c.l.b16 %v183
    %v223 = vunpack.c.l.b16 %v184
    %v224 = vunpack.c.l.b16 %v185
    %v225 = vunpack.c.l.b16 %v186
    %v226 = vunpack.c.l.b16 %v187
    %v227 = vunpack.c.l.b16 %v188
    %v228 = vpack.c.b16 %v213, %v212
    %v229 = vpack.c.b16 %v215, %v214
    %v230 = vpack.c.b16 %v217, %v216
    %v231 = vpack.c.b16 %v219, %v218
    %v232 = vpack.c.b16 %v221, %v220
    %v233 = vpack.c.b16 %v223, %v222
    %v234 = vpack.c.b16 %v225, %v224
    %v235 = vpack.c.b16 %v227, %v226
    %244 = vmatprep.subr.bf16.mxu0 0
    %245 = vmatpush1.bf16.msra.mxu0 %v228
    %246 = vmatprep.subr.bf16.mxu0 0
    %247 = vmatpush1.bf16.msra.mxu0 %v229
    %248 = vmatprep.subr.bf16.mxu0 0
    %249 = vmatpush1.bf16.msra.mxu0 %v230
    %250 = vmatprep.subr.bf16.mxu0 0
    %251 = vmatpush1.bf16.msra.mxu0 %v231
    %252 = vmatprep.subr.bf16.mxu0 0
    %253 = vmatpush1.bf16.msra.mxu0 %v232
    %254 = vmatprep.subr.bf16.mxu0 0
    %255 = vmatpush1.bf16.msra.mxu0 %v233
    %256 = vmatprep.subr.bf16.mxu0 0
    %257 = vmatpush1.bf16.msra.mxu0 %v234
    %258 = vmatprep.subr.bf16.mxu0 0
    %259 = vmatpush1.bf16.msra.mxu0 %v235
    %260 = vmatprep.subr.bf16.mxu0 0
    %261 = vmatpush1.bf16.msra.mxu0 0
    %262 = vmatprep.subr.bf16.mxu0 0
    %263 = vmatpush1.bf16.msra.mxu0 0
    %264 = vmatprep.subr.bf16.mxu0 0
    %265 = vmatpush1.bf16.msra.mxu0 0
    %266 = vmatprep.subr.bf16.mxu0 0
    %267 = vmatpush1.bf16.msra.mxu0 0
    %268 = vmatprep.subr.bf16.mxu0 0
    %269 = vmatpush1.bf16.msra.mxu0 0
    %270 = vmatprep.subr.bf16.mxu0 0
    %271 = vmatpush1.bf16.msra.mxu0 0
    %272 = vmatprep.subr.bf16.mxu0 0
    %273 = vmatpush1.bf16.msra.mxu0 0
    %274 = vmatprep.subr.bf16.mxu0 0
    %275 = vmatpush1.bf16.msra.mxu0 0
    %276 = vmatprep.mubr.bf16.mxu0 0
    %277 = vmatmul.mubr.bf16.gmra.mrb[0].mxu0 %v172
    %v278 = vpop.f32.mrb[0].mxu0
    %v279 = vadd.f32 %v194, %v278
    %v280 = vpop.f32.mrb[0].mxu0
    %v281 = vpop.f32.mrb[0].mxu0
    %v282 = vpop.f32.mrb[0].mxu0
    %283 = vdwg.mxu0
    %v284 = vpack.c.bf16 %v31, %v31
    %v285 = vld [vmem:[%s7] sm:$0xf]
    %v286 = vld [vmem:[%s7 + $0x4] sm:$0xf]
    %v287 = vld [vmem:[%s7 + $0x8] sm:$0xf]
    %v288 = vld [vmem:[%s7 + $0xc] sm:$0xf]
    %v289 = vld [vmem:[%s7 + $0x10] sm:$0xf]
    %v290 = vld [vmem:[%s7 + $0x14] sm:$0xf]
    %v291 = vld [vmem:[%s7 + $0x18] sm:$0xf]
    %v292 = vld [vmem:[%s7 + $0x1c] sm:$0xf]
    %v293 = vld [vmem:[%s7 + $0x20] sm:$0xf]
    %v294 = vld [vmem:[%s7 + $0x24] sm:$0xf]
    %v295 = vld [vmem:[%s7 + $0x28] sm:$0xf]
    %v296 = vld [vmem:[%s7 + $0x2c] sm:$0xf]
    %v297 = vld [vmem:[%s7 + $0x30] sm:$0xf]
    %v298 = vld [vmem:[%s7 + $0x34] sm:$0xf]
    %v299 = vld [vmem:[%s7 + $0x38] sm:$0xf]
    %v300 = vld [vmem:[%s7 + $0x3c] sm:$0xf]
    %v317 = vunpack.c.l.b16 %v285
    %v318 = vunpack.c.l.b16 %v286
    %v319 = vunpack.c.l.b16 %v287
    %v320 = vunpack.c.l.b16 %v288
    %v321 = vunpack.c.l.b16 %v289
    %v322 = vunpack.c.l.b16 %v290
    %v323 = vunpack.c.l.b16 %v291
    %v324 = vunpack.c.l.b16 %v292
    %v325 = vunpack.c.l.b16 %v293
    %v326 = vunpack.c.l.b16 %v294
    %v327 = vunpack.c.l.b16 %v295
    %v328 = vunpack.c.l.b16 %v296
    %v329 = vunpack.c.l.b16 %v297
    %v330 = vunpack.c.l.b16 %v298
    %v331 = vunpack.c.l.b16 %v299
    %v332 = vunpack.c.l.b16 %v300
    %v333 = vpack.c.b16 %v318, %v317
    %v334 = vpack.c.b16 %v320, %v319
    %v335 = vpack.c.b16 %v322, %v321
    %v336 = vpack.c.b16 %v324, %v323
    %v337 = vpack.c.b16 %v326, %v325
    %v338 = vpack.c.b16 %v328, %v327
    %v339 = vpack.c.b16 %v330, %v329
    %v340 = vpack.c.b16 %v332, %v331
    %349 = vmatprep.subr.bf16.mxu0 0
    %350 = vmatpush1.bf16.msra.mxu0 %v333
    %351 = vmatprep.subr.bf16.mxu0 0
    %352 = vmatpush1.bf16.msra.mxu0 %v334
    %353 = vmatprep.subr.bf16.mxu0 0
    %354 = vmatpush1.bf16.msra.mxu0 %v335
    %355 = vmatprep.subr.bf16.mxu0 0
    %356 = vmatpush1.bf16.msra.mxu0 %v336
    %357 = vmatprep.subr.bf16.mxu0 0
    %358 = vmatpush1.bf16.msra.mxu0 %v337
    %359 = vmatprep.subr.bf16.mxu0 0
    %360 = vmatpush1.bf16.msra.mxu0 %v338
    %361 = vmatprep.subr.bf16.mxu0 0
    %362 = vmatpush1.bf16.msra.mxu0 %v339
    %363 = vmatprep.subr.bf16.mxu0 0
    %364 = vmatpush1.bf16.msra.mxu0 %v340
    %365 = vmatprep.subr.bf16.mxu0 0
    %366 = vmatpush1.bf16.msra.mxu0 0
    %367 = vmatprep.subr.bf16.mxu0 0
    %368 = vmatpush1.bf16.msra.mxu0 0
    %369 = vmatprep.subr.bf16.mxu0 0
    %370 = vmatpush1.bf16.msra.mxu0 0
    %371 = vmatprep.subr.bf16.mxu0 0
    %372 = vmatpush1.bf16.msra.mxu0 0
    %373 = vmatprep.subr.bf16.mxu0 0
    %374 = vmatpush1.bf16.msra.mxu0 0
    %375 = vmatprep.subr.bf16.mxu0 0
    %376 = vmatpush1.bf16.msra.mxu0 0
    %377 = vmatprep.subr.bf16.mxu0 0
    %378 = vmatpush1.bf16.msra.mxu0 0
    %379 = vmatprep.subr.bf16.mxu0 0
    %380 = vmatpush1.bf16.msra.mxu0 0
    %381 = vmatprep.mubr.bf16.mxu0 0
    %382 = vmatmul.mubr.bf16.gmra.mrb[0].mxu0 %v284
    %v383 = vpop.f32.mrb[0].mxu0
    %v384 = vadd.f32 %v279, %v383
    %v385 = vpop.f32.mrb[0].mxu0
    %v386 = vpop.f32.mrb[0].mxu0
    %v387 = vpop.f32.mrb[0].mxu0
    %388 = vdwg.mxu0
    %389 = vst [vmem:[#allocation2] sm:$0xff] %v384
    // Predicated region
    $region34: #{residual_block_forward.1} parent=1 // pred_check
      _
    $region35: #{residual_block_forward.1} parent=1 // pred_check_branch
      %391 = sbr.rel (0) target = $region37
    $region36: #{residual_block_forward.1} parent=1 // pred_region
      %s393 = ssub.s32 128, 128
      %394 = vsyncadd [#allocation3], %s393
      %s396 = sshll.u32 [#allocation2], 4
      %s397 = int_to_ptr.vmem [resolvable:$true] %s396
      %399 = dma.vmem_to_hbm [thread:$0]  %s397, 128, %s8, [#allocation3]
    $region37: #{residual_block_forward.1} parent=1 // pred_fallthru
      _
    // Predicated region
    $region38: #{residual_block_forward.1} parent=1 // pred_check
      _
    $region39: #{residual_block_forward.1} parent=1 // pred_check_branch
      %401 = sbr.rel (0) target = $region41
    $region40: #{residual_block_forward.1} parent=1 // pred_region
      %402 = dma.done [#allocation3], 128
    $region41: #{residual_block_forward.1} parent=1 // pred_fallthru
      _
    %403 = vsyncpa [#allocation3], 1

</llo_original>
